<compile_context>
chip_gen: v7x
topology: tpu7x:2x2x1
jax: 0.10.0
libtpu: 0.0.40
codegen_flags: <defaults>
</compile_context>

<pallas_src>
import jax
import jax.numpy as jnp
from jax.experimental import pallas as pl
from jax.experimental.pallas import tpu as pltpu


# ~6 MiB per output tile: in the 4-8 MiB sweet spot that amortizes per-step
# overhead, and 2x (double-buffered) stays under v5e's 16 MiB scoped default.
_TILE_TARGET_BYTES = 6 * 1024 * 1024


def _sublane_pack(dtype):
    return {4: 8, 2: 16, 1: 32}.get(jnp.dtype(dtype).itemsize, 8)


def _gate_row(value, wv, bv, wp, bp, out_dtype):
    # Tiny (rows, out) projection, recomputed per tile (free filler under the
    # output DMA -- deliberately NOT hoisted into the wrapper or a pl.when carry).
    inter_dtype = jnp.result_type(value.dtype, wv.dtype, bv.dtype)
    h = jnp.dot(value, wv, preferred_element_type=jnp.float32) + bv
    h = h.astype(inter_dtype)  # match PyTorch's rounding between the two Linears
    y = jnp.dot(h, wp, preferred_element_type=jnp.float32) + bp
    return y.astype(out_dtype)


def _kernel_3d(value_ref, wv_ref, bv_ref, wp_ref, bp_ref, out_ref):
    # value_ref: (block_b, vdim); out_ref: (block_t, block_b, out)
    y = _gate_row(value_ref[...], wv_ref[...], bv_ref[...],
                  wp_ref[...], bp_ref[...], out_ref.dtype)
    out_ref[...] = jnp.broadcast_to(y[None, :, :], out_ref.shape)


def _kernel_slab(value_ref, wv_ref, bv_ref, wp_ref, bp_ref, out_ref):
    # value_ref: (B, vdim); out_ref: (block_t, B*out)  -- lane-dense slab store
    y = _gate_row(value_ref[...], wv_ref[...], bv_ref[...],
                  wp_ref[...], bp_ref[...], out_ref.dtype)
    out_ref[...] = jnp.broadcast_to(y.reshape(1, -1), out_ref.shape)


def simple_gate_forward(query, value, wv, bv, wp, bp, *, block_t=None):
    """Pallas implementation of SimpleGate.forward.

    query: (T, B, qdim)  (only the shape is used, as in the PyTorch module)
    value: (1, B, vdim)
    wv: (vdim, inter), bv: (1, inter), wp: (inter, out), bp: (1, out)
    returns: (T, B, out_dim)
    """
    T, B, _ = query.shape
    vlen, bsz, vdim = value.shape
    assert vlen == 1 and bsz == B, "SimpleGate requires value sequence length == 1"
    inter = wv.shape[1]
    out_dim = wp.shape[1]
    out_dtype = jnp.result_type(value.dtype, wv.dtype, bv.dtype, wp.dtype, bp.dtype)
    itemsize = jnp.dtype(out_dtype).itemsize

    value2d = value[0]  # (B, vdim)
    row_bytes = B * out_dim * itemsize
    input_bytes = sum(int(x.size) * x.dtype.itemsize
                      for x in (value2d, wv, bv, wp, bp))

    if row_bytes <= _TILE_TARGET_BYTES:
        # ---- common case: one tile spans all of B; grid over T only ----
        if block_t is None:
            block_t = max(1, _TILE_TARGET_BYTES // max(row_bytes, 1))
            # Guarantee >= ~4 grid steps when T permits so the writeback
            # actually pipelines (and v7x gets balanced, even tile counts).
            block_t = min(block_t, max(1, pl.cdiv(T, 4)))
        if block_t < T and T >= 8:
            block_t = max(8, (block_t // 8) * 8)   # 8-aligned second-minor dim
        block_t = max(1, min(block_t, T))
        num_t = pl.cdiv(T, block_t)
        grid = (num_t,)
        grid_points = num_t
        rows_per_step = B
        tile_bytes = block_t * row_bytes
        dim_sem = ("parallel",)

        dense_3d = (out_dim % 128 == 0) and (B % _sublane_pack(out_dtype) == 0)
        if dense_3d:
            kernel = _kernel_3d
            out_shape = jax.ShapeDtypeStruct((T, B, out_dim), out_dtype)
            out_specs = pl.BlockSpec((block_t, B, out_dim), lambda i: (i, 0, 0))
            reshape_back = False
        else:
            # Flattened lane-dense slab; reshaped back (free, row-major) below.
            kernel = _kernel_slab
            out_shape = jax.ShapeDtypeStruct((T, B * out_dim), out_dtype)
            out_specs = pl.BlockSpec((block_t, B * out_dim), lambda i: (i, 0))
            reshape_back = True

        in_specs = [
            pl.BlockSpec((B, vdim), lambda i: (0, 0)),         # value2d (resident)
            pl.BlockSpec((vdim, inter), lambda i: (0, 0)),     # wv
            pl.BlockSpec((1, inter), lambda i: (0, 0)),        # bv
            pl.BlockSpec((inter, out_dim), lambda i: (0, 0)),  # wp
            pl.BlockSpec((1, out_dim), lambda i: (0, 0)),      # bp
        ]
    else:
        # ---- degenerate case: a single (B, out) row exceeds the tile target;
        #      tile B as well so double-buffering fits v5e's 16 MiB default ----
        block_t = 1
        block_b = max(1, _TILE_TARGET_BYTES // max(out_dim * itemsize, 1))
        if block_b < B and B >= 8:
            block_b = max(8, (block_b // 8) * 8)
        block_b = max(1, min(block_b, B))
        num_b = pl.cdiv(B, block_b)
        grid = (T, num_b)
        grid_points = T * num_b
        rows_per_step = block_b
        tile_bytes = block_b * out_dim * itemsize
        dim_sem = ("parallel", "parallel")

        kernel = _kernel_3d
        out_shape = jax.ShapeDtypeStruct((T, B, out_dim), out_dtype)
        out_specs = pl.BlockSpec((1, block_b, out_dim), lambda i, j: (i, j, 0))
        reshape_back = False
        in_specs = [
            pl.BlockSpec((block_b, vdim), lambda i, j: (j, 0)),    # value2d tile
            pl.BlockSpec((vdim, inter), lambda i, j: (0, 0)),
            pl.BlockSpec((1, inter), lambda i, j: (0, 0)),
            pl.BlockSpec((inter, out_dim), lambda i, j: (0, 0)),
            pl.BlockSpec((1, out_dim), lambda i, j: (0, 0)),
        ]

    # Explicit VMEM budget: 2x output tile (double-buffered) + 2x tiny inputs
    # + margin; floor at 16 MiB (safe on every generation's physical VMEM).
    vmem_limit = int(2 * tile_bytes + 2 * input_bytes + (2 << 20))
    vmem_limit = max(vmem_limit, 16 << 20)

    # Advisory cost estimate: mem-bound op, writeback dominates.
    flops = 2 * rows_per_step * (vdim * inter + inter * out_dim) * grid_points
    bytes_accessed = T * B * out_dim * itemsize + input_bytes

    out = pl.pallas_call(
        kernel,
        out_shape=out_shape,
        grid=grid,
        in_specs=in_specs,
        out_specs=out_specs,
        compiler_params=pltpu.CompilerParams(
            dimension_semantics=dim_sem,
            vmem_limit_bytes=vmem_limit),
        cost_estimate=pl.CostEstimate(
            flops=flops, transcendentals=0, bytes_accessed=bytes_accessed),
    )(value2d, wv, bv, wp, bp)

    if reshape_back:
        out = out.reshape(T, B, out_dim)   # free row-major reshape
    return out


def xavier_uniform(key, fan_in, fan_out, dtype=jnp.float32):
    # nn.init.xavier_uniform_ bound = sqrt(6 / (fan_in + fan_out)); symmetric,
    # so generating directly in (in, out) layout is equivalent.
    bound = (6.0 / (fan_in + fan_out)) ** 0.5
    return jax.random.uniform(key, (fan_in, fan_out), dtype, -bound, bound)


def reference_forward(query, value, wv, bv, wp, bp):
    # pure-JAX reference mirroring the PyTorch code (unfused, broadcast via bmm)
    T, B, _ = query.shape
    v = value @ wv + bv                       # (1, B, inter)
    v = jnp.transpose(v, (1, 0, 2))           # (B, 1, inter)
    fake_attn = jnp.ones((B, T, 1), v.dtype)
    x = fake_attn @ v                         # (B, T, inter)
    x = jnp.transpose(x, (1, 0, 2))           # (T, B, inter)
    return x @ wp + bp                        # (T, B, out)


if __name__ == "__main__":
    key = jax.random.PRNGKey(0)
    k_q, k_v, k_wv, k_wp, k_wp2 = jax.random.split(key, 5)

    # --- test 1: dense 3-D path (out_dim % 128 == 0, B % 8 == 0, f32) -------
    vdim, intermediate_dim, output_dim = 32, 64, 128
    T, B, qdim = 128, 8, 32

    query = jax.random.normal(k_q, (T, B, qdim), jnp.float32)
    value = jax.random.normal(k_v, (1, B, vdim), jnp.float32)
    wv = xavier_uniform(k_wv, vdim, intermediate_dim)         # v_proj weight (in, out)
    bv = jnp.zeros((1, intermediate_dim), jnp.float32)        # v_proj bias
    wp = xavier_uniform(k_wp, intermediate_dim, output_dim)   # proj weight (in, out)
    bp = jnp.zeros((1, output_dim), jnp.float32)              # proj bias

    out = jax.block_until_ready(simple_gate_forward(query, value, wv, bv, wp, bp))
    ref = reference_forward(query, value, wv, bv, wp, bp)
    assert out.shape == (T, B, output_dim), out.shape
    assert out.dtype == ref.dtype, (out.dtype, ref.dtype)
    assert jnp.allclose(out, ref, atol=1e-5, rtol=1e-5), "mismatch vs reference (dense path)"

    # --- test 2: lane-dense slab path (out_dim = 64, not a multiple of 128) --
    output_dim2 = 64
    wp2 = xavier_uniform(k_wp2, intermediate_dim, output_dim2)
    bp2 = jnp.zeros((1, output_dim2), jnp.float32)
    out2 = jax.block_until_ready(simple_gate_forward(query, value, wv, bv, wp2, bp2))
    ref2 = reference_forward(query, value, wv, bv, wp2, bp2)
    assert out2.shape == (T, B, output_dim2), out2.shape
    assert jnp.allclose(out2, ref2, atol=1e-5, rtol=1e-5), "mismatch vs reference (slab path)"

    print("KERNEL_OK")
</pallas_src>

<mosaic_0001>
module attributes {stable_mosaic.version = 11 : i64} {
  func.func @_kernel_3d(%arg0: i32, %arg1: memref<8x32xf32, #tpu.memory_space<vmem>>, %arg2: memref<32x64xf32, #tpu.memory_space<vmem>>, %arg3: memref<1x64xf32, #tpu.memory_space<vmem>>, %arg4: memref<64x128xf32, #tpu.memory_space<vmem>>, %arg5: memref<1x128xf32, #tpu.memory_space<vmem>>, %arg6: memref<32x8x128xf32, #tpu.memory_space<vmem>>) attributes {dimension_semantics = [#tpu.dimension_semantics<parallel>], iteration_bounds = array<i64: 4>, scalar_prefetch = 0 : i64, scratch_operands = 0 : i64, tpu.core_type = #tpu.core_type<tc>, window_params = [{pipeline_mode = #tpu.pipeline_mode<synchronous>, transform_indices = @transform_0, window_bounds = array<i64: 8, 32>}, {pipeline_mode = #tpu.pipeline_mode<synchronous>, transform_indices = @transform_1, window_bounds = array<i64: 32, 64>}, {pipeline_mode = #tpu.pipeline_mode<synchronous>, transform_indices = @transform_2, window_bounds = array<i64: 1, 64>}, {pipeline_mode = #tpu.pipeline_mode<synchronous>, transform_indices = @transform_3, window_bounds = array<i64: 64, 128>}, {pipeline_mode = #tpu.pipeline_mode<synchronous>, transform_indices = @transform_4, window_bounds = array<i64: 1, 128>}, {transform_indices = @transform_5, window_bounds = array<i64: 32, 8, 128>}]} {
    %c0 = arith.constant 0 : index
    %c0_0 = arith.constant 0 : index
    %0 = vector.load %arg1[%c0, %c0_0] : memref<8x32xf32, #tpu.memory_space<vmem>>, vector<8x32xf32>
    %c0_1 = arith.constant 0 : index
    %c0_2 = arith.constant 0 : index
    %1 = vector.load %arg2[%c0_1, %c0_2] : memref<32x64xf32, #tpu.memory_space<vmem>>, vector<32x64xf32>
    %c0_3 = arith.constant 0 : index
    %c0_4 = arith.constant 0 : index
    %2 = vector.load %arg3[%c0_3, %c0_4] : memref<1x64xf32, #tpu.memory_space<vmem>>, vector<1x64xf32>
    %c0_5 = arith.constant 0 : index
    %c0_6 = arith.constant 0 : index
    %3 = vector.load %arg4[%c0_5, %c0_6] : memref<64x128xf32, #tpu.memory_space<vmem>>, vector<64x128xf32>
    %c0_7 = arith.constant 0 : index
    %c0_8 = arith.constant 0 : index
    %4 = vector.load %arg5[%c0_7, %c0_8] : memref<1x128xf32, #tpu.memory_space<vmem>>, vector<1x128xf32>
    %cst = arith.constant dense<0.000000e+00> : vector<8x64xf32>
    %5 = tpu.matmul %0, %1, %cst {dimension_numbers = #tpu.dot_dimension_numbers<[1], [0], [0], [1], [0, 0, 1, 1], [], []>} : vector<8x32xf32>, vector<32x64xf32>, vector<8x64xf32> -> vector<8x64xf32>
    %6 = vector.broadcast %2 : vector<1x64xf32> to vector<8x64xf32>
    %7 = arith.addf %5, %6 : vector<8x64xf32>
    %cst_9 = arith.constant dense<0.000000e+00> : vector<8x128xf32>
    %8 = tpu.matmul %7, %3, %cst_9 {dimension_numbers = #tpu.dot_dimension_numbers<[1], [0], [0], [1], [0, 0, 1, 1], [], []>} : vector<8x64xf32>, vector<64x128xf32>, vector<8x128xf32> -> vector<8x128xf32>
    %9 = vector.broadcast %4 : vector<1x128xf32> to vector<8x128xf32>
    %10 = arith.addf %8, %9 : vector<8x128xf32>
    %11 = vector.shape_cast %10 : vector<8x128xf32> to vector<1x8x128xf32>
    %12 = vector.shape_cast %11 : vector<1x8x128xf32> to vector<1x8x128xf32>
    %13 = vector.broadcast %12 : vector<1x8x128xf32> to vector<32x8x128xf32>
    %c0_10 = arith.constant 0 : index
    %c0_11 = arith.constant 0 : index
    %c0_12 = arith.constant 0 : index
    %14 = vector.load %arg6[%c0_10, %c0_11, %c0_12] : memref<32x8x128xf32, #tpu.memory_space<vmem>>, vector<32x8x128xf32>
    tpu.vector_store %arg6[%c0_10, %c0_11, %c0_12], %13 {strides = array<i32>} : memref<32x8x128xf32, #tpu.memory_space<vmem>>, vector<32x8x128xf32>,
    return
  }
  func.func @transform_0(%arg0: i32) -> (i32, i32) {
    %c0_i32 = arith.constant 0 : i32
    %c0_i32_0 = arith.constant 0 : i32
    %c0_i32_1 = arith.constant 0 : i32
    return %c0_i32, %c0_i32_0 : i32, i32
  }
  func.func @transform_1(%arg0: i32) -> (i32, i32) {
    %c0_i32 = arith.constant 0 : i32
    %c0_i32_0 = arith.constant 0 : i32
    %c0_i32_1 = arith.constant 0 : i32
    return %c0_i32, %c0_i32_0 : i32, i32
  }
  func.func @transform_2(%arg0: i32) -> (i32, i32) {
    %c0_i32 = arith.constant 0 : i32
    %c0_i32_0 = arith.constant 0 : i32
    %c0_i32_1 = arith.constant 0 : i32
    return %c0_i32, %c0_i32_0 : i32, i32
  }
  func.func @transform_3(%arg0: i32) -> (i32, i32) {
    %c0_i32 = arith.constant 0 : i32
    %c0_i32_0 = arith.constant 0 : i32
    %c0_i32_1 = arith.constant 0 : i32
    return %c0_i32, %c0_i32_0 : i32, i32
  }
  func.func @transform_4(%arg0: i32) -> (i32, i32) {
    %c0_i32 = arith.constant 0 : i32
    %c0_i32_0 = arith.constant 0 : i32
    %c0_i32_1 = arith.constant 0 : i32
    return %c0_i32, %c0_i32_0 : i32, i32
  }
  func.func @transform_5(%arg0: i32) -> (i32, i32, i32) {
    %c0_i32 = arith.constant 0 : i32
    %c0_i32_0 = arith.constant 0 : i32
    %c0_i32_1 = arith.constant 0 : i32
    return %arg0, %c0_i32, %c0_i32_0 : i32, i32, i32
  }
}

</mosaic_0001>

<llo_original>
// kernel: tpu_custom_call.1
$region0: #{tpu_custom_call.1}
  #allocation0 [shape = 'u32[]', space=smem, size = 0x4, offset = 0x4, fixed_abs, tag = 'smem constant byte address 0x4 - core index']
  #allocation1 [shape = 'u32[144,128]{1,0:T(1,128)}', space=vmem, size = 0x12000, scoped, tag = 'internal scratch']
  %s0 = inlined_call_operand.hbm [shape: f32[8,32], index: 0, kind: input, shape index: {}]
  %s1 = inlined_call_operand.hbm [shape: f32[32,64], index: 1, kind: input, shape index: {}]
  %s2 = inlined_call_operand.vmem [shape: f32[1,64], index: 2, kind: input, shape index: {}]
  %s3 = inlined_call_operand.hbm [shape: f32[64,128], index: 3, kind: input, shape index: {}]
  %s4 = inlined_call_operand.vmem [shape: f32[1,128], index: 4, kind: input, shape index: {}]
  %s5 = inlined_call_operand.hbm [shape: f32[128,8,128], index: 5, kind: output, shape index: {}]
  %s6 = sld [smem:[#allocation0]]
  $region65: #{tpu_custom_call.1} parent=0
    _
  %s8 = ssub.s32 1, %s6
  %s9 = scalar_select 0, %s8, %s6
  $region1: #{tpu_custom_call.1} parent=0
    #allocation2 [shape = 'u8[4096]{0}', space=vmem, size = 0x1000, scoped, tag = 'input window, operand 0, single buffered']
    #allocation3 [shape = 's32[2]{0}', space=sflag, size = 0x8, scoped, tag = 'scoped memory for tpu_custom_call.1']
    #allocation4 [shape = 's32[2]{0}', space=sflag, size = 0x8, scoped, tag = 'scoped memory for tpu_custom_call.1']
    #allocation5 [shape = 'u8[16384]{0}', space=vmem, size = 0x4000, scoped, tag = 'input window, operand 1, single buffered']
    #allocation6 [shape = 's32[1]{0}', space=sflag, size = 0x4, scoped, tag = 'scoped memory for tpu_custom_call.1']
    #allocation7 [shape = 'u8[32768]{0}', space=vmem, size = 0x8000, scoped, tag = 'input window, operand 3, single buffered']
    #allocation8 [shape = 'u8[262144]{0}', space=vmem, size = 0x40000, scoped, tag = 'output window, operand 0']
    %10 = vsyncpa [#allocation3], 0
    %11 = vsyncpa [#allocation6], 0
    %12 = vsyncpa [#allocation4], 0
    %s13 = scalar_lea.sflag [#allocation4], 1
    %14 = vsyncpa %s13, 0
    loop: start=0, step=1, limit=6
    $region2: #{tpu_custom_call.1} parent=1 // loop_pre_header
      _
    $region3: #{tpu_custom_call.1} parent=1 // loop_header
      %s16 = sphi 0, %s20
      %p17 = scmp.ge.s32.totalorder %s16, 6
      %s24 = sphi 0, %s24
      %s26 = sphi 0, %s24
      %s27 = sphi 0, %s26
      %s41 = sphi 0, %s27
      %s45 = sphi 0, %s45
      %s47 = sphi 0, %s45
      %s48 = sphi 0, %s47
      %s62 = sphi 0, %s48
      %s66 = sphi 0, %s66
      %s68 = sphi 0, %s66
      %s69 = sphi 0, %s68
      %s83 = sphi 0, %s69
      %s87 = sphi 0, %s87
      %s89 = sphi 0, %s87
      %s90 = sphi 0, %s89
      %s104 = sphi 0, %s90
      %s108 = sphi 0, %s108
      %s110 = sphi 0, %s108
      %s111 = sphi 0, %s110
      %s125 = sphi 0, %s111
      %s131 = sphi 0, %s133
      %s134 = sphi 0, %s131
      %s135 = sphi 0, %s134
      %s151 = sphi 0, %s135
    $region4: #{tpu_custom_call.1} parent=1 // loop_header_branch
      %19 = sbr.rel (%p17) target = $region8
    $region5: #{tpu_custom_call.1} parent=1 // loop_body
      %s21 = ssub.s32 %s16, 1
      %s22 = ssub.s32 %s16, 2
      %s23 = sadd.s32 %s16, 1
      %s25 = sadd.s32 %s24, 1
      %p28 = scmp.eq.s32.totalorder %s16, 3
      %p29 = scmp.ne.s32.totalorder %s24, %s26
      %p30 = scmp.eq.s32.totalorder %s16, 0
      %p31 = por %p29, %p30
      %p32 = scmp.ne.s32.totalorder %s24, %s26
      %p33 = scmp.eq.s32.totalorder %s21, 3
      %p34 = por %p32, %p33
      %p35 = scmp.ne.s32.totalorder %s26, %s27
      %p36 = scmp.eq.s32.totalorder %s21, 0
      %p37 = por %p35, %p36
      %p38 = scmp.ne.s32.totalorder %s26, %s27
      %p39 = scmp.eq.s32.totalorder %s22, 3
      %p40 = por %p38, %p39
      %p42 = scmp.ne.s32.totalorder %s27, %s41
      %p43 = scmp.eq.s32.totalorder %s22, 0
      %p44 = por %p42, %p43
      %s46 = sadd.s32 %s45, 1
      %p49 = scmp.eq.s32.totalorder %s16, 3
      %p50 = scmp.ne.s32.totalorder %s45, %s47
      %p51 = scmp.eq.s32.totalorder %s16, 0
      %p52 = por %p50, %p51
      %p53 = scmp.ne.s32.totalorder %s45, %s47
      %p54 = scmp.eq.s32.totalorder %s21, 3
      %p55 = por %p53, %p54
      %p56 = scmp.ne.s32.totalorder %s47, %s48
      %p57 = scmp.eq.s32.totalorder %s21, 0
      %p58 = por %p56, %p57
      %p59 = scmp.ne.s32.totalorder %s47, %s48
      %p60 = scmp.eq.s32.totalorder %s22, 3
      %p61 = por %p59, %p60
      %p63 = scmp.ne.s32.totalorder %s48, %s62
      %p64 = scmp.eq.s32.totalorder %s22, 0
      %p65 = por %p63, %p64
      %s67 = sadd.s32 %s66, 1
      %p70 = scmp.eq.s32.totalorder %s16, 3
      %p71 = scmp.ne.s32.totalorder %s66, %s68
      %p72 = scmp.eq.s32.totalorder %s16, 0
      %p73 = por %p71, %p72
      %p74 = scmp.ne.s32.totalorder %s66, %s68
      %p75 = scmp.eq.s32.totalorder %s21, 3
      %p76 = por %p74, %p75
      %p77 = scmp.ne.s32.totalorder %s68, %s69
      %p78 = scmp.eq.s32.totalorder %s21, 0
      %p79 = por %p77, %p78
      %p80 = scmp.ne.s32.totalorder %s68, %s69
      %p81 = scmp.eq.s32.totalorder %s22, 3
      %p82 = por %p80, %p81
      %p84 = scmp.ne.s32.totalorder %s69, %s83
      %p85 = scmp.eq.s32.totalorder %s22, 0
      %p86 = por %p84, %p85
      %s88 = sadd.s32 %s87, 1
      %p91 = scmp.eq.s32.totalorder %s16, 3
      %p92 = scmp.ne.s32.totalorder %s87, %s89
      %p93 = scmp.eq.s32.totalorder %s16, 0
      %p94 = por %p92, %p93
      %p95 = scmp.ne.s32.totalorder %s87, %s89
      %p96 = scmp.eq.s32.totalorder %s21, 3
      %p97 = por %p95, %p96
      %p98 = scmp.ne.s32.totalorder %s89, %s90
      %p99 = scmp.eq.s32.totalorder %s21, 0
      %p100 = por %p98, %p99
      %p101 = scmp.ne.s32.totalorder %s89, %s90
      %p102 = scmp.eq.s32.totalorder %s22, 3
      %p103 = por %p101, %p102
      %p105 = scmp.ne.s32.totalorder %s90, %s104
      %p106 = scmp.eq.s32.totalorder %s22, 0
      %p107 = por %p105, %p106
      %s109 = sadd.s32 %s108, 1
      %p112 = scmp.eq.s32.totalorder %s16, 3
      %p113 = scmp.ne.s32.totalorder %s108, %s110
      %p114 = scmp.eq.s32.totalorder %s16, 0
      %p115 = por %p113, %p114
      %p116 = scmp.ne.s32.totalorder %s108, %s110
      %p117 = scmp.eq.s32.totalorder %s21, 3
      %p118 = por %p116, %p117
      %p119 = scmp.ne.s32.totalorder %s110, %s111
      %p120 = scmp.eq.s32.totalorder %s21, 0
      %p121 = por %p119, %p120
      %p122 = scmp.ne.s32.totalorder %s110, %s111
      %p123 = scmp.eq.s32.totalorder %s22, 3
      %p124 = por %p122, %p123
      %p126 = scmp.ne.s32.totalorder %s111, %s125
      %p127 = scmp.eq.s32.totalorder %s22, 0
      %p128 = por %p126, %p127
      %s129 = ssub.s32 %s16, %s23
      %p130 = scmp.eq.s32.totalorder %s129, 0
      %s132 = sadd.s32 %s131, 1
      %s133 = scalar_select %p130, %s131, %s132
      %p136 = pneg %p130
      %p137 = scmp.eq.s32.totalorder %s16, 3
      %p138 = por %p136, %p137
      %p139 = scmp.ne.s32.totalorder %s131, %s134
      %p140 = scmp.eq.s32.totalorder %s16, 0
      %p141 = por %p139, %p140
      %p142 = scmp.ne.s32.totalorder %s131, %s134
      %p143 = scmp.eq.s32.totalorder %s21, 3
      %p144 = por %p142, %p143
      %p145 = scmp.ne.s32.totalorder %s134, %s135
      %p146 = scmp.eq.s32.totalorder %s21, 0
      %p147 = por %p145, %p146
      %p148 = scmp.ne.s32.totalorder %s134, %s135
      %p149 = scmp.eq.s32.totalorder %s22, 3
      %p150 = por %p148, %p149
      %p152 = scmp.ne.s32.totalorder %s135, %s151
      %p153 = scmp.eq.s32.totalorder %s22, 0
      %p154 = por %p152, %p153
      %p155 = scmp.le.s32.totalorder 1, %s16
      %p156 = scmp.lt.s32.totalorder %s16, 5
      %p157 = pnand %p155, %p156
      %p158 = pneg %p157
      // Predicated region
      $region9: #{tpu_custom_call.1} parent=5 // pred_check
        _
      $region10: #{tpu_custom_call.1} parent=5 // pred_check_branch
        %160 = sbr.rel (%p157) target = $region12
      $region11: #{tpu_custom_call.1} parent=5 // pred_region
        %s161 = ssub.s32 %s16, 1
        // Predicated region
        $region13: #{tpu_custom_call.1} parent=11 // pred_check
          %p162 = pneg %p37
        $region14: #{tpu_custom_call.1} parent=11 // pred_check_branch
          %164 = sbr.rel (%p162) target = $region16
        $region15: #{tpu_custom_call.1} parent=11 // pred_region
          %s166 = ssub.s32 128, 128
          %167 = vsyncadd [#allocation3], %s166
          %s169 = sshll.u32 [#allocation2], 4
          %s170 = int_to_ptr.vmem [resolvable:$true] %s169
          %172 = dma.hbm_to_vmem [thread:$0]  %s0, 128, %s170, [#allocation3]
        $region16: #{tpu_custom_call.1} parent=11 // pred_fallthru
          _
        // Predicated region
        $region17: #{tpu_custom_call.1} parent=11 // pred_check
          %p173 = pneg %p58
        $region18: #{tpu_custom_call.1} parent=11 // pred_check_branch
          %175 = sbr.rel (%p173) target = $region20
        $region19: #{tpu_custom_call.1} parent=11 // pred_region
          %s177 = ssub.s32 512, 512
          %178 = vsyncadd [#allocation6], %s177
          %s179 = sshll.u32 [#allocation5], 4
          %s180 = int_to_ptr.vmem [resolvable:$true] %s179
          %185 = dma.hbm_to_vmem [thread:$0]  %s1, 512, %s180, [#allocation6], 128, 128, 8
        $region20: #{tpu_custom_call.1} parent=11 // pred_fallthru
          _
        // Predicated region
        $region21: #{tpu_custom_call.1} parent=11 // pred_check
          %p186 = pneg %p79
        $region22: #{tpu_custom_call.1} parent=11 // pred_check_branch
          %188 = sbr.rel (%p186) target = $region24
        $region23: #{tpu_custom_call.1} parent=11 // pred_region
          _
        $region24: #{tpu_custom_call.1} parent=11 // pred_fallthru
          _
        // Predicated region
        $region25: #{tpu_custom_call.1} parent=11 // pred_check
          %p189 = pneg %p100
        $region26: #{tpu_custom_call.1} parent=11 // pred_check_branch
          %191 = sbr.rel (%p189) target = $region28
        $region27: #{tpu_custom_call.1} parent=11 // pred_region
          %s193 = ssub.s32 1024, 1024
          %194 = vsyncadd [#allocation6], %s193
          %s195 = sshll.u32 [#allocation7], 4
          %s196 = int_to_ptr.vmem [resolvable:$true] %s195
          %201 = dma.hbm_to_vmem [thread:$0]  %s3, 1024, %s196, [#allocation6], 128, 128, 8
        $region28: #{tpu_custom_call.1} parent=11 // pred_fallthru
          _
        // Predicated region
        $region29: #{tpu_custom_call.1} parent=11 // pred_check
          %p202 = pneg %p121
        $region30: #{tpu_custom_call.1} parent=11 // pred_check_branch
          %204 = sbr.rel (%p202) target = $region32
        $region31: #{tpu_custom_call.1} parent=11 // pred_region
          _
        $region32: #{tpu_custom_call.1} parent=11 // pred_fallthru
          _
      $region12: #{tpu_custom_call.1} parent=5 // pred_fallthru
        _
      %p205 = scmp.lt.s32.totalorder %s16, 4
      // Predicated region
      $region33: #{tpu_custom_call.1} parent=5 // pred_check
        %p206 = pneg %p205
      $region34: #{tpu_custom_call.1} parent=5 // pred_check_branch
        %208 = sbr.rel (%p206) target = $region36
      $region35: #{tpu_custom_call.1} parent=5 // pred_region
        _
      $region36: #{tpu_custom_call.1} parent=5 // pred_fallthru
        _
      %p209 = scmp.le.s32.totalorder 1, %s16
      %p210 = scmp.lt.s32.totalorder %s16, 5
      %p211 = pnand %p209, %p210
      %p212 = pneg %p211
      // Predicated region
      $region37: #{tpu_custom_call.1} parent=5 // pred_check
        _
      $region38: #{tpu_custom_call.1} parent=5 // pred_check_branch
        %214 = sbr.rel (%p211) target = $region40
      $region39: #{tpu_custom_call.1} parent=5 // pred_region
        %s215 = ssub.s32 %s16, 1
        // Predicated region
        $region41: #{tpu_custom_call.1} parent=39 // pred_check
          %p216 = pneg %p37
        $region42: #{tpu_custom_call.1} parent=39 // pred_check_branch
          %218 = sbr.rel (%p216) target = $region44
        $region43: #{tpu_custom_call.1} parent=39 // pred_region
          %219 = dma.done [#allocation3], 128
        $region44: #{tpu_custom_call.1} parent=39 // pred_fallthru
          _
        // Predicated region
        $region45: #{tpu_custom_call.1} parent=39 // pred_check
          %p220 = pneg %p58
        $region46: #{tpu_custom_call.1} parent=39 // pred_check_branch
          %222 = sbr.rel (%p220) target = $region48
        $region47: #{tpu_custom_call.1} parent=39 // pred_region
          %223 = dma.done [#allocation6], 512
        $region48: #{tpu_custom_call.1} parent=39 // pred_fallthru
          _
        // Predicated region
        $region49: #{tpu_custom_call.1} parent=39 // pred_check
          %p224 = pneg %p100
        $region50: #{tpu_custom_call.1} parent=39 // pred_check_branch
          %226 = sbr.rel (%p224) target = $region52
        $region51: #{tpu_custom_call.1} parent=39 // pred_region
          %227 = dma.done [#allocation6], 1024
        $region52: #{tpu_custom_call.1} parent=39 // pred_fallthru
          _
        %p228 = pneg %p37
        %p229 = pneg %p34
        %p230 = pneg %p58
        %p231 = pneg %p55
        %p232 = pneg %p79
        %p233 = pneg %p76
        %p234 = pneg %p100
        %p235 = pneg %p97
        %p236 = pneg %p121
        %p237 = pneg %p118
        %p238 = pneg %p147
        %p239 = pneg %p144
        %s240 = sand.u32 %s134, 1
        %s241 = scalar_lea.sflag [#allocation4], %s240
        %s242 = sand.u32 %s134, 1
        %s243 = smul.addr %s242, 256
        %s244 = scalar_lea.vmem [#allocation8], %s243
        %s245 = smul.u32 32, %s21
        %v246 = vld [vmem:[#allocation2] sm:$0xff]
        %v247 = vld [vmem:[#allocation5] sm:$0xff]
        %v248 = vld [vmem:[#allocation5 + $0x8] sm:$0xff]
        %v249 = vld [vmem:[#allocation5 + $0x10] sm:$0xff]
        %v250 = vld [vmem:[#allocation5 + $0x18] sm:$0xff]
        %v251 = vld [vmem:[%s2] sm:$0x1]
        %v252 = vld [vmem:[#allocation7] sm:$0xff]
        %v253 = vld [vmem:[#allocation7 + $0x8] sm:$0xff]
        %v254 = vld [vmem:[#allocation7 + $0x10] sm:$0xff]
        %v255 = vld [vmem:[#allocation7 + $0x18] sm:$0xff]
        %v256 = vld [vmem:[#allocation7 + $0x20] sm:$0xff]
        %v257 = vld [vmem:[#allocation7 + $0x28] sm:$0xff]
        %v258 = vld [vmem:[#allocation7 + $0x30] sm:$0xff]
        %v259 = vld [vmem:[#allocation7 + $0x38] sm:$0xff]
        %v260 = vld [vmem:[%s4] sm:$0x1]
        %v262 = vlaneseq
        %v263 = vshrl.u32 %v262, 7
        %v264 = vsub.s32 0, %v263
        %v265 = vrot.slane %v251, %v264
        %vm267 = vcmask 261120
        %v269 = vsel %vm267, %v246, 0
        %271 = vmatprep.subr.mxu0 0.0
        %272 = vmatpush1.msra.mxu0 %v247
        %273 = vmatprep.subr.mxu0 0.0
        %274 = vmatpush1.msra.mxu0 %v248
        %275 = vmatprep.subr.mxu0 0.0
        %276 = vmatpush1.msra.mxu0 %v249
        %277 = vmatprep.subr.mxu0 0.0
        %278 = vmatpush1.msra.mxu0 %v250
        %279 = vmatprep.subr.mxu0 0.0
        %280 = vmatpush1.msra.mxu0 0.0
        %281 = vmatprep.subr.mxu0 0.0
        %282 = vmatpush1.msra.mxu0 0.0
        %283 = vmatprep.subr.mxu0 0.0
        %284 = vmatpush1.msra.mxu0 0.0
        %285 = vmatprep.subr.mxu0 0.0
        %286 = vmatpush1.msra.mxu0 0.0
        %287 = vmatprep.subr.mxu0 0.0
        %288 = vmatpush1.msra.mxu0 0.0
        %289 = vmatprep.subr.mxu0 0.0
        %290 = vmatpush1.msra.mxu0 0.0
        %291 = vmatprep.subr.mxu0 0.0
        %292 = vmatpush1.msra.mxu0 0.0
        %293 = vmatprep.subr.mxu0 0.0
        %294 = vmatpush1.msra.mxu0 0.0
        %295 = vmatprep.subr.mxu0 0.0
        %296 = vmatpush1.msra.mxu0 0.0
        %297 = vmatprep.subr.mxu0 0.0
        %298 = vmatpush1.msra.mxu0 0.0
        %299 = vmatprep.subr.mxu0 0.0
        %300 = vmatpush1.msra.mxu0 0.0
        %301 = vmatprep.subr.mxu0 0.0
        %302 = vmatpush1.msra.mxu0 0.0
        %303 = vmatprep.subr.mxu0 0.0
        %304 = vmatpush1.msra.mxu0 0.0
        %305 = vmatprep.subr.mxu0 0.0
        %306 = vmatpush1.msra.mxu0 0.0
        %307 = vmatprep.subr.mxu0 0.0
        %308 = vmatpush1.msra.mxu0 0.0
        %309 = vmatprep.subr.mxu0 0.0
        %310 = vmatpush1.msra.mxu0 0.0
        %311 = vmatprep.subr.mxu0 0.0
        %312 = vmatpush1.msra.mxu0 0.0
        %313 = vmatprep.subr.mxu0 0.0
        %314 = vmatpush1.msra.mxu0 0.0
        %315 = vmatprep.subr.mxu0 0.0
        %316 = vmatpush1.msra.mxu0 0.0
        %317 = vmatprep.subr.mxu0 0.0
        %318 = vmatpush1.msra.mxu0 0.0
        %319 = vmatprep.subr.mxu0 0.0
        %320 = vmatpush1.msra.mxu0 0.0
        %321 = vmatprep.subr.mxu0 0.0
        %322 = vmatpush1.msra.mxu0 0.0
        %323 = vmatprep.subr.mxu0 0.0
        %324 = vmatpush1.msra.mxu0 0.0
        %325 = vmatprep.subr.mxu0 0.0
        %326 = vmatpush1.msra.mxu0 0.0
        %327 = vmatprep.subr.mxu0 0.0
        %328 = vmatpush1.msra.mxu0 0.0
        %329 = vmatprep.subr.mxu0 0.0
        %330 = vmatpush1.msra.mxu0 0.0
        %331 = vmatprep.subr.mxu0 0.0
        %332 = vmatpush1.msra.mxu0 0.0
        %333 = vmatprep.subr.mxu0 0.0
        %334 = vmatpush1.msra.mxu0 0.0
        %335 = vmatprep.mubr.f32.mxu0 0.0
        %336 = vmatmul.mubr.f32.gmra.mrb[0].mxu0 %v269
        %v337 = vpop.f32.mrb[0].mxu0
        %v338 = vadd.f32 %v265, %v337
        %v339 = vpop.f32.mrb[0].mxu0
        %340 = vdwg.mxu0
        %v342 = vlaneseq
        %v343 = vshrl.u32 %v342, 7
        %v344 = vsub.s32 0, %v343
        %v345 = vrot.slane %v260, %v344
        %vm347 = vcmask 523264
        %v349 = vsel %vm347, %v338, 0
        %351 = vmatprep.subr.mxu0 0.0
        %352 = vmatpush1.msra.mxu0 %v252
        %353 = vmatprep.subr.mxu0 0.0
        %354 = vmatpush1.msra.mxu0 %v253
        %355 = vmatprep.subr.mxu0 0.0
        %356 = vmatpush1.msra.mxu0 %v254
        %357 = vmatprep.subr.mxu0 0.0
        %358 = vmatpush1.msra.mxu0 %v255
        %359 = vmatprep.subr.mxu0 0.0
        %360 = vmatpush1.msra.mxu0 %v256
        %361 = vmatprep.subr.mxu0 0.0
        %362 = vmatpush1.msra.mxu0 %v257
        %363 = vmatprep.subr.mxu0 0.0
        %364 = vmatpush1.msra.mxu0 %v258
        %365 = vmatprep.subr.mxu0 0.0
        %366 = vmatpush1.msra.mxu0 %v259
        %367 = vmatprep.subr.mxu0 0.0
        %368 = vmatpush1.msra.mxu0 0.0
        %369 = vmatprep.subr.mxu0 0.0
        %370 = vmatpush1.msra.mxu0 0.0
        %371 = vmatprep.subr.mxu0 0.0
        %372 = vmatpush1.msra.mxu0 0.0
        %373 = vmatprep.subr.mxu0 0.0
        %374 = vmatpush1.msra.mxu0 0.0
        %375 = vmatprep.subr.mxu0 0.0
        %376 = vmatpush1.msra.mxu0 0.0
        %377 = vmatprep.subr.mxu0 0.0
        %378 = vmatpush1.msra.mxu0 0.0
        %379 = vmatprep.subr.mxu0 0.0
        %380 = vmatpush1.msra.mxu0 0.0
        %381 = vmatprep.subr.mxu0 0.0
        %382 = vmatpush1.msra.mxu0 0.0
        %383 = vmatprep.subr.mxu0 0.0
        %384 = vmatpush1.msra.mxu0 0.0
        %385 = vmatprep.subr.mxu0 0.0
        %386 = vmatpush1.msra.mxu0 0.0
        %387 = vmatprep.subr.mxu0 0.0
        %388 = vmatpush1.msra.mxu0 0.0
        %389 = vmatprep.subr.mxu0 0.0
        %390 = vmatpush1.msra.mxu0 0.0
        %391 = vmatprep.subr.mxu0 0.0
        %392 = vmatpush1.msra.mxu0 0.0
        %393 = vmatprep.subr.mxu0 0.0
        %394 = vmatpush1.msra.mxu0 0.0
        %395 = vmatprep.subr.mxu0 0.0
        %396 = vmatpush1.msra.mxu0 0.0
        %397 = vmatprep.subr.mxu0 0.0
        %398 = vmatpush1.msra.mxu0 0.0
        %399 = vmatprep.subr.mxu0 0.0
        %400 = vmatpush1.msra.mxu0 0.0
        %401 = vmatprep.subr.mxu0 0.0
        %402 = vmatpush1.msra.mxu0 0.0
        %403 = vmatprep.subr.mxu0 0.0
        %404 = vmatpush1.msra.mxu0 0.0
        %405 = vmatprep.subr.mxu0 0.0
        %406 = vmatpush1.msra.mxu0 0.0
        %407 = vmatprep.subr.mxu0 0.0
        %408 = vmatpush1.msra.mxu0 0.0
        %409 = vmatprep.subr.mxu0 0.0
        %410 = vmatpush1.msra.mxu0 0.0
        %411 = vmatprep.subr.mxu0 0.0
        %412 = vmatpush1.msra.mxu0 0.0
        %413 = vmatprep.subr.mxu0 0.0
        %414 = vmatpush1.msra.mxu0 0.0
        %415 = vmatprep.mubr.f32.mxu0 0.0
        %416 = vmatmul.mubr.f32.gmra.mrb[0].mxu0 %v349
        %v417 = vpop.f32.mrb[0].mxu0
        %v418 = vadd.f32 %v345, %v417
        %v419 = vpop.f32.mrb[0].mxu0
        %420 = vdwg.mxu0
        %421 = vst [vmem:[%s244] sm:$0xff] %v418
        %422 = vst [vmem:[%s244 + $0x8] sm:$0xff] %v418
        %423 = vst [vmem:[%s244 + $0x10] sm:$0xff] %v418
        %424 = vst [vmem:[%s244 + $0x18] sm:$0xff] %v418
        %425 = vst [vmem:[%s244 + $0x20] sm:$0xff] %v418
        %426 = vst [vmem:[%s244 + $0x28] sm:$0xff] %v418
        %427 = vst [vmem:[%s244 + $0x30] sm:$0xff] %v418
        %428 = vst [vmem:[%s244 + $0x38] sm:$0xff] %v418
        %429 = vst [vmem:[%s244 + $0x40] sm:$0xff] %v418
        %430 = vst [vmem:[%s244 + $0x48] sm:$0xff] %v418
        %431 = vst [vmem:[%s244 + $0x50] sm:$0xff] %v418
        %432 = vst [vmem:[%s244 + $0x58] sm:$0xff] %v418
        %433 = vst [vmem:[%s244 + $0x60] sm:$0xff] %v418
        %434 = vst [vmem:[%s244 + $0x68] sm:$0xff] %v418
        %435 = vst [vmem:[%s244 + $0x70] sm:$0xff] %v418
        %436 = vst [vmem:[%s244 + $0x78] sm:$0xff] %v418
        %437 = vst [vmem:[%s244 + $0x80] sm:$0xff] %v418
        %438 = vst [vmem:[%s244 + $0x88] sm:$0xff] %v418
        %439 = vst [vmem:[%s244 + $0x90] sm:$0xff] %v418
        %440 = vst [vmem:[%s244 + $0x98] sm:$0xff] %v418
        %441 = vst [vmem:[%s244 + $0xa0] sm:$0xff] %v418
        %442 = vst [vmem:[%s244 + $0xa8] sm:$0xff] %v418
        %443 = vst [vmem:[%s244 + $0xb0] sm:$0xff] %v418
        %444 = vst [vmem:[%s244 + $0xb8] sm:$0xff] %v418
        %445 = vst [vmem:[%s244 + $0xc0] sm:$0xff] %v418
        %446 = vst [vmem:[%s244 + $0xc8] sm:$0xff] %v418
        %447 = vst [vmem:[%s244 + $0xd0] sm:$0xff] %v418
        %448 = vst [vmem:[%s244 + $0xd8] sm:$0xff] %v418
        %449 = vst [vmem:[%s244 + $0xe0] sm:$0xff] %v418
        %450 = vst [vmem:[%s244 + $0xe8] sm:$0xff] %v418
        %451 = vst [vmem:[%s244 + $0xf0] sm:$0xff] %v418
        %452 = vst [vmem:[%s244 + $0xf8] sm:$0xff] %v418
        %s453 = sand.u32 %s134, 1
        %s454 = scalar_lea.sflag [#allocation4], %s453
        %s455 = sand.u32 %s134, 1
        %s456 = smul.addr %s455, 256
        %s457 = scalar_lea.vmem [#allocation8], %s456
        // Predicated region
        $region53: #{tpu_custom_call.1} parent=39 // pred_check
          %p458 = pneg %p144
        $region54: #{tpu_custom_call.1} parent=39 // pred_check_branch
          %460 = sbr.rel (%p458) target = $region56
        $region55: #{tpu_custom_call.1} parent=39 // pred_region
          %s461 = smul.u32 32, %s21
          %s463 = ssub.s32 4096, 4096
          %464 = vsyncadd %s454, %s463
          %s465 = smul.addr %s461, 128
          %s466 = scalar_lea.hbm %s5, %s465
          %s467 = sshll.u32 %s457, 4
          %s468 = int_to_ptr.vmem [resolvable:$true] %s467
          %473 = dma.vmem_to_hbm [thread:$0]  %s468, 4096, %s466, %s454, 128, 128, 8
        $region56: #{tpu_custom_call.1} parent=39 // pred_fallthru
          _
      $region40: #{tpu_custom_call.1} parent=5 // pred_fallthru
        _
      %p474 = scmp.le.s32.totalorder 2, %s16
      // Predicated region
      $region57: #{tpu_custom_call.1} parent=5 // pred_check
        %p475 = pneg %p474
      $region58: #{tpu_custom_call.1} parent=5 // pred_check_branch
        %477 = sbr.rel (%p475) target = $region60
      $region59: #{tpu_custom_call.1} parent=5 // pred_region
        %s478 = ssub.s32 %s16, 2
        // Predicated region
        $region61: #{tpu_custom_call.1} parent=59 // pred_check
          %p479 = pneg %p150
        $region62: #{tpu_custom_call.1} parent=59 // pred_check_branch
          %481 = sbr.rel (%p479) target = $region64
        $region63: #{tpu_custom_call.1} parent=59 // pred_region
          %s482 = sand.u32 %s135, 1
          %s483 = scalar_lea.sflag [#allocation4], %s482
          %s484 = sand.u32 %s135, 1
          %s485 = smul.addr %s484, 256
          %s486 = scalar_lea.vmem [#allocation8], %s485
          %487 = dma.done %s483, 4096
        $region64: #{tpu_custom_call.1} parent=59 // pred_fallthru
          _
      $region60: #{tpu_custom_call.1} parent=5 // pred_fallthru
        _
    $region6: #{tpu_custom_call.1} parent=1 // loop_footer
      %s20 = sadd.s32 1, %s16
    $region7: #{tpu_custom_call.1} parent=1 // loop_footer_branch
      %15 = sbr.rel target = $region3
    $region8: #{tpu_custom_call.1} parent=1 // loop_exit
      _
    %488 = vsyncpa [#allocation3], 1
    %s489 = scalar_lea.sflag [#allocation3], 1
    %490 = vsyncpa %s489, 1
    %491 = vsyncpa [#allocation6], 1
    %492 = vsyncpa [#allocation4], 1
    %s493 = scalar_lea.sflag [#allocation4], 1
    %494 = vsyncpa %s493, 1

</llo_original>
